<compile_context>
chip_gen: v6e
topology: v6e:2x2x1
jax: 0.10.0
libtpu: 0.0.40
codegen_flags: <defaults>
</compile_context>

<pallas_src>
import numpy as np
import jax
import jax.numpy as jnp
from jax.experimental import pallas as pl
from jax.experimental.pallas import tpu as pltpu

FILT_SIZE = 4
STRIDE = 2

# 1-D binomial filter for filt_size=4, normalized so the separable product
# _W1[di] * _W1[dj] equals outer([1,3,3,1],[1,3,3,1])[di,dj] / 64 exactly.
_A1 = (1.0, 3.0, 3.0, 1.0)
_W1 = tuple(a / sum(_A1) for a in _A1)          # (1/8, 3/8, 3/8, 1/8)


def _blurpool_kernel(ph_ref, o_ref):
    """Depthwise 4x4 / stride-2 blur on a polyphase, channels-last block.

    ph_ref: (4, 1, Ho+1, Wo+1, TC) VMEM.  Phase index = 2*p + q, where
            phase_{p,q}[i, j, c] = x_pad[2*i + p, 2*j + q, c].
    o_ref : (1, Ho, Wo, TC) VMEM.
    """
    Ho, Wo = o_ref.shape[1], o_ref.shape[2]

    # Horizontal (column) pass, one partial result per row-phase p:
    #   h_p[i, j, c] = sum_dj _W1[dj] * x_pad[2*i + p, 2*j + dj, c]
    # Column tap 2*j + dj lives in phase q = dj % 2 at column j + dj // 2, so
    # the only shifts are +0/+1 on the sublane (W) axis -- never on lanes (C).
    h = []
    for p in range(2):
        acc = None
        for dj in range(FILT_SIZE):
            b, q = divmod(dj, STRIDE)                       # dj = 2*b + q
            tap = ph_ref[2 * p + q, 0, :, b:b + Wo, :].astype(jnp.float32)
            term = tap * _W1[dj]
            acc = term if acc is None else acc + term
        h.append(acc)                                       # (Ho+1, Wo, TC) f32

    # Vertical (row) pass: row tap 2*i + di -> h_{di % 2}[i + di // 2]
    # (shifts only on the untiled leading H dim -- free).
    out = None
    for di in range(FILT_SIZE):
        a, p = divmod(di, STRIDE)
        term = h[p][a:a + Ho] * _W1[di]
        out = term if out is None else out + term
    o_ref[0] = out.astype(o_ref.dtype)


def blurpool_nhwc(x, *, pad_type="reflect", pad_off=0):
    """BlurPool on a channels-last tensor.  x: (N, H, W, C) -> (N, Ho, Wo, C)."""
    N, H, W, C = x.shape
    pad_lo = (FILT_SIZE - 1) // 2 + pad_off
    pad_hi = int(np.ceil((FILT_SIZE - 1) / 2.0)) + pad_off
    mode = {"reflect": "reflect", "refl": "reflect",
            "replicate": "edge", "repl": "edge", "zero": "constant"}[pad_type]

    Hp, Wp = H + pad_lo + pad_hi, W + pad_lo + pad_hi
    Ho = (Hp - FILT_SIZE) // STRIDE + 1
    Wo = (Wp - FILT_SIZE) // STRIDE + 1

    # Glue: pad + polyphase split as one jnp expression so XLA fuses it into a
    # single HBM pass producing the phases array.
    # phases[2*p + q] = x_pad[:, p::2, q::2, :] sliced to exactly (Ho+1, Wo+1)
    # rows/cols; 2*Ho + 1 <= Hp - 1 and 2*Wo + 1 <= Wp - 1, so every element
    # read by the kernel is real padded data (no second "even-ing" pad).
    xp = jnp.pad(x, ((0, 0), (pad_lo, pad_hi), (pad_lo, pad_hi), (0, 0)),
                 mode=mode)
    phases = jnp.stack(
        [xp[:, p:p + 2 * (Ho + 1):2, q:q + 2 * (Wo + 1):2, :]
         for p in range(STRIDE) for q in range(STRIDE)],
        axis=0)                                   # (4, N, Ho+1, Wo+1, C)

    # Channel tiling: lane-aligned 128-wide tiles when possible (the (8,128)
    # rule forces TC == C otherwise).
    TC = 128 if C % 128 == 0 else C
    grid = (N, C // TC)
    # TODO(synk): row-tile very large spatial extents with a 1-row halo
    # (pl.Element window or manual DMA) so per-step VMEM stays bounded.

    itemsize = jnp.dtype(x.dtype).itemsize
    in_block = 4 * (Ho + 1) * (Wo + 1) * TC * itemsize
    out_block = Ho * Wo * TC * itemsize
    f32_tmps = 3 * (Ho + 1) * (Wo + 1) * TC * 4    # h_0, h_1, accumulator
    vmem_need = 2 * (in_block + out_block) + f32_tmps + (2 << 20)
    cp_kwargs = dict(dimension_semantics=("parallel", "parallel"))
    if vmem_need > (32 << 20):
        cp_kwargs["vmem_limit_bytes"] = int(min(vmem_need, 64 << 20))

    out = pl.pallas_call(
        _blurpool_kernel,
        out_shape=jax.ShapeDtypeStruct((N, Ho, Wo, C), x.dtype),
        grid=grid,
        in_specs=[
            pl.BlockSpec((4, 1, Ho + 1, Wo + 1, TC),
                         lambda n, c: (0, n, 0, 0, c)),
        ],
        out_specs=pl.BlockSpec((1, Ho, Wo, TC), lambda n, c: (n, 0, 0, c)),
        compiler_params=pltpu.CompilerParams(**cp_kwargs),
    )(phases)
    return out


def blurpool(x, *, pad_type="reflect", pad_off=0):
    """BlurPool matching the PyTorch module (NCHW in, NCHW out).

    The NCHW<->NHWC transposes here are wrapper-side layout plumbing; callers
    whose pipeline is already channels-last should call `blurpool_nhwc`.
    """
    x_nhwc = jnp.transpose(x, (0, 2, 3, 1))
    out_nhwc = blurpool_nhwc(x_nhwc, pad_type=pad_type, pad_off=pad_off)
    return jnp.transpose(out_nhwc, (0, 3, 1, 2))


def _reference_nchw(x, *, pad_type="reflect"):
    """Pure-JAX reference: ReflectionPad2d([1,2,1,2]) + depthwise conv stride 2."""
    C = x.shape[1]
    a = np.asarray(_A1)
    filt = a[:, None] * a[None, :]
    filt = filt / filt.sum()
    w = jnp.broadcast_to(jnp.asarray(filt, jnp.float32)[None, None],
                         (C, 1, FILT_SIZE, FILT_SIZE))
    mode = {"reflect": "reflect", "replicate": "edge", "zero": "constant"}[pad_type]
    xp = jnp.pad(x, ((0, 0), (0, 0), (1, 2), (1, 2)), mode=mode)
    return jax.lax.conv_general_dilated(
        xp, w, window_strides=(STRIDE, STRIDE), padding="VALID",
        dimension_numbers=("NCHW", "OIHW", "NCHW"), feature_group_count=C)


if __name__ == "__main__":
    key = jax.random.PRNGKey(0)
    blurpool_jit = jax.jit(blurpool)

    cases = [
        ((2, 4, 16, 16), jnp.float32),    # module-like small shape
        ((1, 4, 15, 17), jnp.float32),    # odd spatial dims (parity paths)
        ((2, 4, 16, 16), jnp.bfloat16),   # bf16 activations, f32 accumulation
    ]
    for shape, dtype in cases:
        key, sub = jax.random.split(key)
        x = jax.random.normal(sub, shape, dtype=jnp.float32).astype(dtype)

        out = jax.block_until_ready(blurpool_jit(x))
        ref = _reference_nchw(x.astype(jnp.float32))

        tol = 1e-5 if dtype == jnp.float32 else 3e-2
        np.testing.assert_allclose(np.asarray(out, dtype=np.float32),
                                   np.asarray(ref), rtol=tol, atol=tol)

    print("KERNEL_OK")
</pallas_src>

<mosaic_0001>
module attributes {stable_mosaic.version = 11 : i64} {
  func.func @_blurpool_kernel(%arg0: i32, %arg1: i32, %arg2: memref<4x1x9x9x4xf32, #tpu.memory_space<vmem>>, %arg3: memref<1x8x8x4xf32, #tpu.memory_space<vmem>>) attributes {dimension_semantics = [#tpu.dimension_semantics<parallel>, #tpu.dimension_semantics<parallel>], iteration_bounds = array<i64: 2, 1>, scalar_prefetch = 0 : i64, scratch_operands = 0 : i64, tpu.core_type = #tpu.core_type<tc>, window_params = [{transform_indices = @transform_0, window_bounds = array<i64: 4, 1, 9, 9, 4>}, {transform_indices = @transform_1, window_bounds = array<i64: 1, 8, 8, 4>}]} {
    %c0 = arith.constant 0 : index
    %c0_0 = arith.constant 0 : index
    %c0_1 = arith.constant 0 : index
    %c0_2 = arith.constant 0 : index
    %c0_3 = arith.constant 0 : index
    %0 = vector.load %arg2[%c0, %c0_0, %c0_1, %c0_2, %c0_3] : memref<4x1x9x9x4xf32, #tpu.memory_space<vmem>>, vector<1x1x9x8x4xf32>
    %1 = vector.shape_cast %0 : vector<1x1x9x8x4xf32> to vector<9x8x4xf32>
    %cst = arith.constant 1.250000e-01 : f32
    %2 = vector.broadcast %cst : f32 to vector<9x8x4xf32>
    %3 = arith.mulf %1, %2 : vector<9x8x4xf32>
    %c1 = arith.constant 1 : index
    %c0_4 = arith.constant 0 : index
    %c0_5 = arith.constant 0 : index
    %c0_6 = arith.constant 0 : index
    %c0_7 = arith.constant 0 : index
    %4 = vector.load %arg2[%c1, %c0_4, %c0_5, %c0_6, %c0_7] : memref<4x1x9x9x4xf32, #tpu.memory_space<vmem>>, vector<1x1x9x8x4xf32>
    %5 = vector.shape_cast %4 : vector<1x1x9x8x4xf32> to vector<9x8x4xf32>
    %cst_8 = arith.constant 3.750000e-01 : f32
    %6 = vector.broadcast %cst_8 : f32 to vector<9x8x4xf32>
    %7 = arith.mulf %5, %6 : vector<9x8x4xf32>
    %8 = arith.addf %3, %7 : vector<9x8x4xf32>
    %c0_9 = arith.constant 0 : index
    %c0_10 = arith.constant 0 : index
    %c0_11 = arith.constant 0 : index
    %c1_12 = arith.constant 1 : index
    %c0_13 = arith.constant 0 : index
    %9 = vector.load %arg2[%c0_9, %c0_10, %c0_11, %c1_12, %c0_13] : memref<4x1x9x9x4xf32, #tpu.memory_space<vmem>>, vector<1x1x9x8x4xf32>
    %10 = vector.shape_cast %9 : vector<1x1x9x8x4xf32> to vector<9x8x4xf32>
    %cst_14 = arith.constant 3.750000e-01 : f32
    %11 = vector.broadcast %cst_14 : f32 to vector<9x8x4xf32>
    %12 = arith.mulf %10, %11 : vector<9x8x4xf32>
    %13 = arith.addf %8, %12 : vector<9x8x4xf32>
    %c1_15 = arith.constant 1 : index
    %c0_16 = arith.constant 0 : index
    %c0_17 = arith.constant 0 : index
    %c1_18 = arith.constant 1 : index
    %c0_19 = arith.constant 0 : index
    %14 = vector.load %arg2[%c1_15, %c0_16, %c0_17, %c1_18, %c0_19] : memref<4x1x9x9x4xf32, #tpu.memory_space<vmem>>, vector<1x1x9x8x4xf32>
    %15 = vector.shape_cast %14 : vector<1x1x9x8x4xf32> to vector<9x8x4xf32>
    %cst_20 = arith.constant 1.250000e-01 : f32
    %16 = vector.broadcast %cst_20 : f32 to vector<9x8x4xf32>
    %17 = arith.mulf %15, %16 : vector<9x8x4xf32>
    %18 = arith.addf %13, %17 : vector<9x8x4xf32>
    %c2 = arith.constant 2 : index
    %c0_21 = arith.constant 0 : index
    %c0_22 = arith.constant 0 : index
    %c0_23 = arith.constant 0 : index
    %c0_24 = arith.constant 0 : index
    %19 = vector.load %arg2[%c2, %c0_21, %c0_22, %c0_23, %c0_24] : memref<4x1x9x9x4xf32, #tpu.memory_space<vmem>>, vector<1x1x9x8x4xf32>
    %20 = vector.shape_cast %19 : vector<1x1x9x8x4xf32> to vector<9x8x4xf32>
    %cst_25 = arith.constant 1.250000e-01 : f32
    %21 = vector.broadcast %cst_25 : f32 to vector<9x8x4xf32>
    %22 = arith.mulf %20, %21 : vector<9x8x4xf32>
    %c3 = arith.constant 3 : index
    %c0_26 = arith.constant 0 : index
    %c0_27 = arith.constant 0 : index
    %c0_28 = arith.constant 0 : index
    %c0_29 = arith.constant 0 : index
    %23 = vector.load %arg2[%c3, %c0_26, %c0_27, %c0_28, %c0_29] : memref<4x1x9x9x4xf32, #tpu.memory_space<vmem>>, vector<1x1x9x8x4xf32>
    %24 = vector.shape_cast %23 : vector<1x1x9x8x4xf32> to vector<9x8x4xf32>
    %cst_30 = arith.constant 3.750000e-01 : f32
    %25 = vector.broadcast %cst_30 : f32 to vector<9x8x4xf32>
    %26 = arith.mulf %24, %25 : vector<9x8x4xf32>
    %27 = arith.addf %22, %26 : vector<9x8x4xf32>
    %c2_31 = arith.constant 2 : index
    %c0_32 = arith.constant 0 : index
    %c0_33 = arith.constant 0 : index
    %c1_34 = arith.constant 1 : index
    %c0_35 = arith.constant 0 : index
    %28 = vector.load %arg2[%c2_31, %c0_32, %c0_33, %c1_34, %c0_35] : memref<4x1x9x9x4xf32, #tpu.memory_space<vmem>>, vector<1x1x9x8x4xf32>
    %29 = vector.shape_cast %28 : vector<1x1x9x8x4xf32> to vector<9x8x4xf32>
    %cst_36 = arith.constant 3.750000e-01 : f32
    %30 = vector.broadcast %cst_36 : f32 to vector<9x8x4xf32>
    %31 = arith.mulf %29, %30 : vector<9x8x4xf32>
    %32 = arith.addf %27, %31 : vector<9x8x4xf32>
    %c3_37 = arith.constant 3 : index
    %c0_38 = arith.constant 0 : index
    %c0_39 = arith.constant 0 : index
    %c1_40 = arith.constant 1 : index
    %c0_41 = arith.constant 0 : index
    %33 = vector.load %arg2[%c3_37, %c0_38, %c0_39, %c1_40, %c0_41] : memref<4x1x9x9x4xf32, #tpu.memory_space<vmem>>, vector<1x1x9x8x4xf32>
    %34 = vector.shape_cast %33 : vector<1x1x9x8x4xf32> to vector<9x8x4xf32>
    %cst_42 = arith.constant 1.250000e-01 : f32
    %35 = vector.broadcast %cst_42 : f32 to vector<9x8x4xf32>
    %36 = arith.mulf %34, %35 : vector<9x8x4xf32>
    %37 = arith.addf %32, %36 : vector<9x8x4xf32>
    %38 = vector.extract_strided_slice %18 {offsets = [0, 0, 0], sizes = [8, 8, 4], strides = [1, 1, 1]} : vector<9x8x4xf32> to vector<8x8x4xf32>
    %cst_43 = arith.constant 1.250000e-01 : f32
    %39 = vector.broadcast %cst_43 : f32 to vector<8x8x4xf32>
    %40 = arith.mulf %38, %39 : vector<8x8x4xf32>
    %41 = vector.extract_strided_slice %37 {offsets = [0, 0, 0], sizes = [8, 8, 4], strides = [1, 1, 1]} : vector<9x8x4xf32> to vector<8x8x4xf32>
    %cst_44 = arith.constant 3.750000e-01 : f32
    %42 = vector.broadcast %cst_44 : f32 to vector<8x8x4xf32>
    %43 = arith.mulf %41, %42 : vector<8x8x4xf32>
    %44 = arith.addf %40, %43 : vector<8x8x4xf32>
    %45 = vector.extract_strided_slice %18 {offsets = [1, 0, 0], sizes = [8, 8, 4], strides = [1, 1, 1]} : vector<9x8x4xf32> to vector<8x8x4xf32>
    %cst_45 = arith.constant 3.750000e-01 : f32
    %46 = vector.broadcast %cst_45 : f32 to vector<8x8x4xf32>
    %47 = arith.mulf %45, %46 : vector<8x8x4xf32>
    %48 = arith.addf %44, %47 : vector<8x8x4xf32>
    %49 = vector.extract_strided_slice %37 {offsets = [1, 0, 0], sizes = [8, 8, 4], strides = [1, 1, 1]} : vector<9x8x4xf32> to vector<8x8x4xf32>
    %cst_46 = arith.constant 1.250000e-01 : f32
    %50 = vector.broadcast %cst_46 : f32 to vector<8x8x4xf32>
    %51 = arith.mulf %49, %50 : vector<8x8x4xf32>
    %52 = arith.addf %48, %51 : vector<8x8x4xf32>
    %c0_47 = arith.constant 0 : index
    %c0_48 = arith.constant 0 : index
    %c0_49 = arith.constant 0 : index
    %c0_50 = arith.constant 0 : index
    %53 = vector.load %arg3[%c0_47, %c0_48, %c0_49, %c0_50] : memref<1x8x8x4xf32, #tpu.memory_space<vmem>>, vector<1x8x8x4xf32>
    %54 = vector.shape_cast %53 : vector<1x8x8x4xf32> to vector<8x8x4xf32>
    %55 = vector.shape_cast %52 : vector<8x8x4xf32> to vector<1x8x8x4xf32>
    tpu.vector_store %arg3[%c0_47, %c0_48, %c0_49, %c0_50], %55 {strides = array<i32>} : memref<1x8x8x4xf32, #tpu.memory_space<vmem>>, vector<1x8x8x4xf32>,
    return
  }
  func.func @transform_0(%arg0: i32, %arg1: i32) -> (i32, i32, i32, i32, i32) {
    %c0_i32 = arith.constant 0 : i32
    %c0_i32_0 = arith.constant 0 : i32
    %c0_i32_1 = arith.constant 0 : i32
    %c0_i32_2 = arith.constant 0 : i32
    return %c0_i32, %arg0, %c0_i32_0, %c0_i32_1, %arg1 : i32, i32, i32, i32, i32
  }
  func.func @transform_1(%arg0: i32, %arg1: i32) -> (i32, i32, i32, i32) {
    %c0_i32 = arith.constant 0 : i32
    %c0_i32_0 = arith.constant 0 : i32
    %c0_i32_1 = arith.constant 0 : i32
    return %arg0, %c0_i32, %c0_i32_0, %arg1 : i32, i32, i32, i32
  }
}

</mosaic_0001>

<llo_original>
// kernel: blurpool.1
$region0: #{blurpool.1}
  #allocation0 [shape = 'u32[]', space=smem, size = 0x4, offset = 0x4, fixed_abs, tag = 'smem constant byte address 0x4 - core index']
  #allocation1 [shape = 'u32[144,128]{1,0:T(1,128)}', space=vmem, size = 0x12000, scoped, tag = 'internal scratch']
  %s0 = inlined_call_operand.vmem [shape: f32[4,2,9,9,4], index: 0, kind: input, shape index: {}]
  %s1 = inlined_call_operand.vmem [shape: f32[2,8,8,4], index: 1, kind: output, shape index: {}]
  %s2 = sld [smem:[#allocation0]]
  $region75: #{blurpool.1} parent=0
    _
  %s4 = ssub.s32 1, %s2
  %s5 = scalar_select 0, %s4, %s2
  $region1: #{blurpool.1} parent=0
    #allocation2 [shape = 'u8[589824]{0}', space=vmem, size = 0x90000, scoped, tag = 'input window, operand 0']
    loop: start=0, step=1, limit=4
    $region2: #{blurpool.1} parent=1 // loop_pre_header
      _
    $region3: #{blurpool.1} parent=1 // loop_header
      %s7 = sphi 0, %s11
      %p8 = scmp.ge.s32.totalorder %s7, 4
      %s14 = sphi 0, %s26
      %s15 = sphi 0, %s22
      %s16 = sphi 0, %s14
      %s17 = sphi 0, %s15
      %s18 = sphi 0, %s16
      %s19 = sphi 0, %s17
      %s31 = sphi 0, %s33
      %s34 = sphi 0, %s31
      %s35 = sphi 0, %s34
      %s51 = sphi 0, %s35
      %s59 = sphi 0, %s61
      %s62 = sphi 0, %s59
      %s63 = sphi 0, %s62
      %s79 = sphi 0, %s63
    $region4: #{blurpool.1} parent=1 // loop_header_branch
      %10 = sbr.rel (%p8) target = $region8
    $region5: #{blurpool.1} parent=1 // loop_body
      %s12 = ssub.s32 %s7, 1
      %s13 = ssub.s32 %s7, 2
      %s20 = sadd.s32 1, %s15
      %p21 = scmp.ge.s32.totalorder %s20, 1
      %s22 = scalar_select %p21, 0, %s20
      %s23 = sadd.s32 1, %s14
      %s24 = scalar_select %p21, %s23, %s14
      %p25 = scmp.ge.s32.totalorder %s24, 2
      %s26 = scalar_select %p25, 0, %s24
      %s27 = ssub.s32 %s14, %s26
      %s28 = ssub.s32 %s15, %s22
      %s29 = sor.u32 %s27, %s28
      %p30 = scmp.eq.s32.totalorder %s29, 0
      %s32 = sadd.s32 %s31, 1
      %s33 = scalar_select %p30, %s31, %s32
      %p36 = pneg %p30
      %p37 = scmp.eq.s32.totalorder %s7, 1
      %p38 = por %p36, %p37
      %p39 = scmp.ne.s32.totalorder %s31, %s34
      %p40 = scmp.eq.s32.totalorder %s7, 0
      %p41 = por %p39, %p40
      %p42 = scmp.ne.s32.totalorder %s31, %s34
      %p43 = scmp.eq.s32.totalorder %s12, 1
      %p44 = por %p42, %p43
      %p45 = scmp.ne.s32.totalorder %s34, %s35
      %p46 = scmp.eq.s32.totalorder %s12, 0
      %p47 = por %p45, %p46
      %p48 = scmp.ne.s32.totalorder %s34, %s35
      %p49 = scmp.eq.s32.totalorder %s13, 1
      %p50 = por %p48, %p49
      %p52 = scmp.ne.s32.totalorder %s35, %s51
      %p53 = scmp.eq.s32.totalorder %s13, 0
      %p54 = por %p52, %p53
      %s55 = ssub.s32 %s14, %s26
      %s56 = ssub.s32 %s15, %s22
      %s57 = sor.u32 %s55, %s56
      %p58 = scmp.eq.s32.totalorder %s57, 0
      %s60 = sadd.s32 %s59, 1
      %s61 = scalar_select %p58, %s59, %s60
      %p64 = pneg %p58
      %p65 = scmp.eq.s32.totalorder %s7, 1
      %p66 = por %p64, %p65
      %p67 = scmp.ne.s32.totalorder %s59, %s62
      %p68 = scmp.eq.s32.totalorder %s7, 0
      %p69 = por %p67, %p68
      %p70 = scmp.ne.s32.totalorder %s59, %s62
      %p71 = scmp.eq.s32.totalorder %s12, 1
      %p72 = por %p70, %p71
      %p73 = scmp.ne.s32.totalorder %s62, %s63
      %p74 = scmp.eq.s32.totalorder %s12, 0
      %p75 = por %p73, %p74
      %p76 = scmp.ne.s32.totalorder %s62, %s63
      %p77 = scmp.eq.s32.totalorder %s13, 1
      %p78 = por %p76, %p77
      %p80 = scmp.ne.s32.totalorder %s63, %s79
      %p81 = scmp.eq.s32.totalorder %s13, 0
      %p82 = por %p80, %p81
      %p83 = scmp.le.s32.totalorder 1, %s7
      %p84 = scmp.lt.s32.totalorder %s7, 3
      %p85 = pnand %p83, %p84
      %p86 = pneg %p85
      // Predicated region
      $region9: #{blurpool.1} parent=5 // pred_check
        _
      $region10: #{blurpool.1} parent=5 // pred_check_branch
        %88 = sbr.rel (%p85) target = $region12
      $region11: #{blurpool.1} parent=5 // pred_region
        %s89 = ssub.s32 %s7, 1
      $region12: #{blurpool.1} parent=5 // pred_fallthru
        _
      %p90 = scmp.lt.s32.totalorder %s7, 2
      // Predicated region
      $region13: #{blurpool.1} parent=5 // pred_check
        %p91 = pneg %p90
      $region14: #{blurpool.1} parent=5 // pred_check_branch
        %93 = sbr.rel (%p91) target = $region16
      $region15: #{blurpool.1} parent=5 // pred_region
        // Predicated region
        $region17: #{blurpool.1} parent=15 // pred_check
          %p94 = pneg %p41
        $region18: #{blurpool.1} parent=15 // pred_check_branch
          %96 = sbr.rel (%p94) target = $region20
        $region19: #{blurpool.1} parent=15 // pred_region
          %s97 = sand.u32 %s31, 1
          %s98 = sand.u32 %s31, 1
          %s99 = smul.addr %s98, 576
          %s100 = scalar_lea.vmem [#allocation2], %s99
          %s101 = smul.addr %s14, 18
          %s102 = sadd.s32 %s15, %s101
          %s103 = smul.addr %s102, 8
          %s104 = scalar_lea.vmem %s0, %s103
          // Predicated region
          $region21: #{blurpool.1} parent=19 // pred_check
            _
          $region22: #{blurpool.1} parent=19 // pred_check_branch
            %106 = sbr.rel (0) target = $region24
          $region23: #{blurpool.1} parent=19 // pred_region
            // Predicated region
            $region25: #{blurpool.1} parent=23 // pred_check
              _
            $region26: #{blurpool.1} parent=23 // pred_check_branch
              %108 = sbr.rel (0) target = $region28
            $region27: #{blurpool.1} parent=23 // pred_region
              // Predicated region
              $region40: #{blurpool.1} parent=27 // pred_check
                _
              $region41: #{blurpool.1} parent=27 // pred_check_branch
                %266 = sbr.rel (0) target = $region43
              $region42: #{blurpool.1} parent=27 // pred_region
                loop: start=0, step=1, limit=1
                $region44: #{blurpool.1} parent=42 // loop_pre_header
                  _
                $region45: #{blurpool.1} parent=42 // loop_header
                  %s268 = sphi 0, %s272
                  %p269 = scmp.ge.s32.totalorder %s268, 1
                  %s273 = sphi %s104, %s104
                  %s274 = sphi %s100, %s100
                $region46: #{blurpool.1} parent=42 // loop_header_branch
                  %271 = sbr.rel (%p269) target = $region50
                $region47: #{blurpool.1} parent=42 // loop_body
                  %v275 = vld [vmem:[%s273] sm:$0xff]
                  %276 = vst [vmem:[%s274] sm:$0xff] %v275
                  %v277 = vld [vmem:[%s273 + $0x8] sm:$0xff]
                  %278 = vst [vmem:[%s274 + $0x8] sm:$0xff] %v277
                  %v279 = vld [vmem:[%s273 + $0x10] sm:$0xff]
                  %280 = vst [vmem:[%s274 + $0x10] sm:$0xff] %v279
                  %v281 = vld [vmem:[%s273 + $0x18] sm:$0xff]
                  %282 = vst [vmem:[%s274 + $0x18] sm:$0xff] %v281
                  %v283 = vld [vmem:[%s273 + $0x20] sm:$0xff]
                  %284 = vst [vmem:[%s274 + $0x20] sm:$0xff] %v283
                  %v285 = vld [vmem:[%s273 + $0x28] sm:$0xff]
                  %286 = vst [vmem:[%s274 + $0x28] sm:$0xff] %v285
                  %v287 = vld [vmem:[%s273 + $0x30] sm:$0xff]
                  %288 = vst [vmem:[%s274 + $0x30] sm:$0xff] %v287
                  %v289 = vld [vmem:[%s273 + $0x38] sm:$0xff]
                  %290 = vst [vmem:[%s274 + $0x38] sm:$0xff] %v289
                  %v291 = vld [vmem:[%s273 + $0x40] sm:$0xff]
                  %292 = vst [vmem:[%s274 + $0x40] sm:$0xff] %v291
                  %v293 = vld [vmem:[%s273 + $0x48] sm:$0xff]
                  %294 = vst [vmem:[%s274 + $0x48] sm:$0xff] %v293
                  %v295 = vld [vmem:[%s273 + $0x50] sm:$0xff]
                  %296 = vst [vmem:[%s274 + $0x50] sm:$0xff] %v295
                  %v297 = vld [vmem:[%s273 + $0x58] sm:$0xff]
                  %298 = vst [vmem:[%s274 + $0x58] sm:$0xff] %v297
                  %v299 = vld [vmem:[%s273 + $0x60] sm:$0xff]
                  %300 = vst [vmem:[%s274 + $0x60] sm:$0xff] %v299
                  %v301 = vld [vmem:[%s273 + $0x68] sm:$0xff]
                  %302 = vst [vmem:[%s274 + $0x68] sm:$0xff] %v301
                  %v303 = vld [vmem:[%s273 + $0x70] sm:$0xff]
                  %304 = vst [vmem:[%s274 + $0x70] sm:$0xff] %v303
                  %v305 = vld [vmem:[%s273 + $0x78] sm:$0xff]
                  %306 = vst [vmem:[%s274 + $0x78] sm:$0xff] %v305
                  %v307 = vld [vmem:[%s273 + $0x80] sm:$0xff]
                  %308 = vst [vmem:[%s274 + $0x80] sm:$0xff] %v307
                  %v309 = vld [vmem:[%s273 + $0x88] sm:$0xff]
                  %310 = vst [vmem:[%s274 + $0x88] sm:$0xff] %v309
                  %v311 = vld [vmem:[%s273 + $0x120] sm:$0xff]
                  %312 = vst [vmem:[%s274 + $0x90] sm:$0xff] %v311
                  %v313 = vld [vmem:[%s273 + $0x128] sm:$0xff]
                  %314 = vst [vmem:[%s274 + $0x98] sm:$0xff] %v313
                  %v315 = vld [vmem:[%s273 + $0x130] sm:$0xff]
                  %316 = vst [vmem:[%s274 + $0xa0] sm:$0xff] %v315
                  %v317 = vld [vmem:[%s273 + $0x138] sm:$0xff]
                  %318 = vst [vmem:[%s274 + $0xa8] sm:$0xff] %v317
                  %v319 = vld [vmem:[%s273 + $0x140] sm:$0xff]
                  %320 = vst [vmem:[%s274 + $0xb0] sm:$0xff] %v319
                  %v321 = vld [vmem:[%s273 + $0x148] sm:$0xff]
                  %322 = vst [vmem:[%s274 + $0xb8] sm:$0xff] %v321
                  %v323 = vld [vmem:[%s273 + $0x150] sm:$0xff]
                  %324 = vst [vmem:[%s274 + $0xc0] sm:$0xff] %v323
                  %v325 = vld [vmem:[%s273 + $0x158] sm:$0xff]
                  %326 = vst [vmem:[%s274 + $0xc8] sm:$0xff] %v325
                  %v327 = vld [vmem:[%s273 + $0x160] sm:$0xff]
                  %328 = vst [vmem:[%s274 + $0xd0] sm:$0xff] %v327
                  %v329 = vld [vmem:[%s273 + $0x168] sm:$0xff]
                  %330 = vst [vmem:[%s274 + $0xd8] sm:$0xff] %v329
                  %v331 = vld [vmem:[%s273 + $0x170] sm:$0xff]
                  %332 = vst [vmem:[%s274 + $0xe0] sm:$0xff] %v331
                  %v333 = vld [vmem:[%s273 + $0x178] sm:$0xff]
                  %334 = vst [vmem:[%s274 + $0xe8] sm:$0xff] %v333
                  %v335 = vld [vmem:[%s273 + $0x180] sm:$0xff]
                  %336 = vst [vmem:[%s274 + $0xf0] sm:$0xff] %v335
                  %v337 = vld [vmem:[%s273 + $0x188] sm:$0xff]
                  %338 = vst [vmem:[%s274 + $0xf8] sm:$0xff] %v337
                  %v339 = vld [vmem:[%s273 + $0x190] sm:$0xff]
                  %340 = vst [vmem:[%s274 + $0x100] sm:$0xff] %v339
                  %v341 = vld [vmem:[%s273 + $0x198] sm:$0xff]
                  %342 = vst [vmem:[%s274 + $0x108] sm:$0xff] %v341
                  %v343 = vld [vmem:[%s273 + $0x1a0] sm:$0xff]
                  %344 = vst [vmem:[%s274 + $0x110] sm:$0xff] %v343
                  %v345 = vld [vmem:[%s273 + $0x1a8] sm:$0xff]
                  %346 = vst [vmem:[%s274 + $0x118] sm:$0xff] %v345
                  %v347 = vld [vmem:[%s273 + $0x240] sm:$0xff]
                  %348 = vst [vmem:[%s274 + $0x120] sm:$0xff] %v347
                  %v349 = vld [vmem:[%s273 + $0x248] sm:$0xff]
                  %350 = vst [vmem:[%s274 + $0x128] sm:$0xff] %v349
                  %v351 = vld [vmem:[%s273 + $0x250] sm:$0xff]
                  %352 = vst [vmem:[%s274 + $0x130] sm:$0xff] %v351
                  %v353 = vld [vmem:[%s273 + $0x258] sm:$0xff]
                  %354 = vst [vmem:[%s274 + $0x138] sm:$0xff] %v353
                  %v355 = vld [vmem:[%s273 + $0x260] sm:$0xff]
                  %356 = vst [vmem:[%s274 + $0x140] sm:$0xff] %v355
                  %v357 = vld [vmem:[%s273 + $0x268] sm:$0xff]
                  %358 = vst [vmem:[%s274 + $0x148] sm:$0xff] %v357
                  %v359 = vld [vmem:[%s273 + $0x270] sm:$0xff]
                  %360 = vst [vmem:[%s274 + $0x150] sm:$0xff] %v359
                  %v361 = vld [vmem:[%s273 + $0x278] sm:$0xff]
                  %362 = vst [vmem:[%s274 + $0x158] sm:$0xff] %v361
                  %v363 = vld [vmem:[%s273 + $0x280] sm:$0xff]
                  %364 = vst [vmem:[%s274 + $0x160] sm:$0xff] %v363
                  %v365 = vld [vmem:[%s273 + $0x288] sm:$0xff]
                  %366 = vst [vmem:[%s274 + $0x168] sm:$0xff] %v365
                  %v367 = vld [vmem:[%s273 + $0x290] sm:$0xff]
                  %368 = vst [vmem:[%s274 + $0x170] sm:$0xff] %v367
                  %v369 = vld [vmem:[%s273 + $0x298] sm:$0xff]
                  %370 = vst [vmem:[%s274 + $0x178] sm:$0xff] %v369
                  %v371 = vld [vmem:[%s273 + $0x2a0] sm:$0xff]
                  %372 = vst [vmem:[%s274 + $0x180] sm:$0xff] %v371
                  %v373 = vld [vmem:[%s273 + $0x2a8] sm:$0xff]
                  %374 = vst [vmem:[%s274 + $0x188] sm:$0xff] %v373
                  %v375 = vld [vmem:[%s273 + $0x2b0] sm:$0xff]
                  %376 = vst [vmem:[%s274 + $0x190] sm:$0xff] %v375
                  %v377 = vld [vmem:[%s273 + $0x2b8] sm:$0xff]
                  %378 = vst [vmem:[%s274 + $0x198] sm:$0xff] %v377
                  %v379 = vld [vmem:[%s273 + $0x2c0] sm:$0xff]
                  %380 = vst [vmem:[%s274 + $0x1a0] sm:$0xff] %v379
                  %v381 = vld [vmem:[%s273 + $0x2c8] sm:$0xff]
                  %382 = vst [vmem:[%s274 + $0x1a8] sm:$0xff] %v381
                  %v383 = vld [vmem:[%s273 + $0x360] sm:$0xff]
                  %384 = vst [vmem:[%s274 + $0x1b0] sm:$0xff] %v383
                  %v385 = vld [vmem:[%s273 + $0x368] sm:$0xff]
                  %386 = vst [vmem:[%s274 + $0x1b8] sm:$0xff] %v385
                  %v387 = vld [vmem:[%s273 + $0x370] sm:$0xff]
                  %388 = vst [vmem:[%s274 + $0x1c0] sm:$0xff] %v387
                  %v389 = vld [vmem:[%s273 + $0x378] sm:$0xff]
                  %390 = vst [vmem:[%s274 + $0x1c8] sm:$0xff] %v389
                  %v391 = vld [vmem:[%s273 + $0x380] sm:$0xff]
                  %392 = vst [vmem:[%s274 + $0x1d0] sm:$0xff] %v391
                  %v393 = vld [vmem:[%s273 + $0x388] sm:$0xff]
                  %394 = vst [vmem:[%s274 + $0x1d8] sm:$0xff] %v393
                  %v395 = vld [vmem:[%s273 + $0x390] sm:$0xff]
                  %396 = vst [vmem:[%s274 + $0x1e0] sm:$0xff] %v395
                  %v397 = vld [vmem:[%s273 + $0x398] sm:$0xff]
                  %398 = vst [vmem:[%s274 + $0x1e8] sm:$0xff] %v397
                  %v399 = vld [vmem:[%s273 + $0x3a0] sm:$0xff]
                  %400 = vst [vmem:[%s274 + $0x1f0] sm:$0xff] %v399
                  %v401 = vld [vmem:[%s273 + $0x3a8] sm:$0xff]
                  %402 = vst [vmem:[%s274 + $0x1f8] sm:$0xff] %v401
                  %v403 = vld [vmem:[%s273 + $0x3b0] sm:$0xff]
                  %404 = vst [vmem:[%s274 + $0x200] sm:$0xff] %v403
                  %v405 = vld [vmem:[%s273 + $0x3b8] sm:$0xff]
                  %406 = vst [vmem:[%s274 + $0x208] sm:$0xff] %v405
                  %v407 = vld [vmem:[%s273 + $0x3c0] sm:$0xff]
                  %408 = vst [vmem:[%s274 + $0x210] sm:$0xff] %v407
                  %v409 = vld [vmem:[%s273 + $0x3c8] sm:$0xff]
                  %410 = vst [vmem:[%s274 + $0x218] sm:$0xff] %v409
                  %v411 = vld [vmem:[%s273 + $0x3d0] sm:$0xff]
                  %412 = vst [vmem:[%s274 + $0x220] sm:$0xff] %v411
                  %v413 = vld [vmem:[%s273 + $0x3d8] sm:$0xff]
                  %414 = vst [vmem:[%s274 + $0x228] sm:$0xff] %v413
                  %v415 = vld [vmem:[%s273 + $0x3e0] sm:$0xff]
                  %416 = vst [vmem:[%s274 + $0x230] sm:$0xff] %v415
                  %v417 = vld [vmem:[%s273 + $0x3e8] sm:$0xff]
                  %418 = vst [vmem:[%s274 + $0x238] sm:$0xff] %v417
                $region48: #{blurpool.1} parent=42 // loop_footer
                  %s272 = sadd.s32 1, %s268
                $region49: #{blurpool.1} parent=42 // loop_footer_branch
                  %267 = sbr.rel target = $region45
                $region50: #{blurpool.1} parent=42 // loop_exit
                  _
              $region43: #{blurpool.1} parent=27 // pred_fallthru
                _
              // Predicated region
              $region51: #{blurpool.1} parent=27 // pred_check
                _
              $region52: #{blurpool.1} parent=27 // pred_check_branch
                %420 = sbr.rel target = $region54
              $region53: #{blurpool.1} parent=27 // pred_region
                _
              $region54: #{blurpool.1} parent=27 // pred_fallthru
                _
            $region28: #{blurpool.1} parent=23 // pred_fallthru
              _
            // Predicated region
            $region29: #{blurpool.1} parent=23 // pred_check
              _
            $region30: #{blurpool.1} parent=23 // pred_check_branch
              %110 = sbr.rel target = $region32
            $region31: #{blurpool.1} parent=23 // pred_region
              %s112 = ssub.s32 256, 1
              loop: start=0, step=1, limit=1
              $region33: #{blurpool.1} parent=31 // loop_pre_header
                _
              $region34: #{blurpool.1} parent=31 // loop_header
                %s114 = sphi 0, %s118
                %p115 = scmp.ge.s32.totalorder %s114, 1
                %s119 = sphi %s104, %s104
                %s120 = sphi %s100, %s100
              $region35: #{blurpool.1} parent=31 // loop_header_branch
                %117 = sbr.rel (%p115) target = $region39
              $region36: #{blurpool.1} parent=31 // loop_body
                %v121 = vld [vmem:[%s119] sm:%s112]
                %122 = vst [vmem:[%s120] sm:%s112] %v121
                %v123 = vld [vmem:[%s119 + $0x8] sm:%s112]
                %124 = vst [vmem:[%s120 + $0x8] sm:%s112] %v123
                %v125 = vld [vmem:[%s119 + $0x10] sm:%s112]
                %126 = vst [vmem:[%s120 + $0x10] sm:%s112] %v125
                %v127 = vld [vmem:[%s119 + $0x18] sm:%s112]
                %128 = vst [vmem:[%s120 + $0x18] sm:%s112] %v127
                %v129 = vld [vmem:[%s119 + $0x20] sm:%s112]
                %130 = vst [vmem:[%s120 + $0x20] sm:%s112] %v129
                %v131 = vld [vmem:[%s119 + $0x28] sm:%s112]
                %132 = vst [vmem:[%s120 + $0x28] sm:%s112] %v131
                %v133 = vld [vmem:[%s119 + $0x30] sm:%s112]
                %134 = vst [vmem:[%s120 + $0x30] sm:%s112] %v133
                %v135 = vld [vmem:[%s119 + $0x38] sm:%s112]
                %136 = vst [vmem:[%s120 + $0x38] sm:%s112] %v135
                %v137 = vld [vmem:[%s119 + $0x40] sm:%s112]
                %138 = vst [vmem:[%s120 + $0x40] sm:%s112] %v137
                %v139 = vld [vmem:[%s119 + $0x48] sm:%s112]
                %140 = vst [vmem:[%s120 + $0x48] sm:%s112] %v139
                %v141 = vld [vmem:[%s119 + $0x50] sm:%s112]
                %142 = vst [vmem:[%s120 + $0x50] sm:%s112] %v141
                %v143 = vld [vmem:[%s119 + $0x58] sm:%s112]
                %144 = vst [vmem:[%s120 + $0x58] sm:%s112] %v143
                %v145 = vld [vmem:[%s119 + $0x60] sm:%s112]
                %146 = vst [vmem:[%s120 + $0x60] sm:%s112] %v145
                %v147 = vld [vmem:[%s119 + $0x68] sm:%s112]
                %148 = vst [vmem:[%s120 + $0x68] sm:%s112] %v147
                %v149 = vld [vmem:[%s119 + $0x70] sm:%s112]
                %150 = vst [vmem:[%s120 + $0x70] sm:%s112] %v149
                %v151 = vld [vmem:[%s119 + $0x78] sm:%s112]
                %152 = vst [vmem:[%s120 + $0x78] sm:%s112] %v151
                %v153 = vld [vmem:[%s119 + $0x80] sm:%s112]
                %154 = vst [vmem:[%s120 + $0x80] sm:%s112] %v153
                %v155 = vld [vmem:[%s119 + $0x88] sm:%s112]
                %156 = vst [vmem:[%s120 + $0x88] sm:%s112] %v155
                %v157 = vld [vmem:[%s119 + $0x120] sm:%s112]
                %158 = vst [vmem:[%s120 + $0x90] sm:%s112] %v157
                %v159 = vld [vmem:[%s119 + $0x128] sm:%s112]
                %160 = vst [vmem:[%s120 + $0x98] sm:%s112] %v159
                %v161 = vld [vmem:[%s119 + $0x130] sm:%s112]
                %162 = vst [vmem:[%s120 + $0xa0] sm:%s112] %v161
                %v163 = vld [vmem:[%s119 + $0x138] sm:%s112]
                %164 = vst [vmem:[%s120 + $0xa8] sm:%s112] %v163
                %v165 = vld [vmem:[%s119 + $0x140] sm:%s112]
                %166 = vst [vmem:[%s120 + $0xb0] sm:%s112] %v165
                %v167 = vld [vmem:[%s119 + $0x148] sm:%s112]
                %168 = vst [vmem:[%s120 + $0xb8] sm:%s112] %v167
                %v169 = vld [vmem:[%s119 + $0x150] sm:%s112]
                %170 = vst [vmem:[%s120 + $0xc0] sm:%s112] %v169
                %v171 = vld [vmem:[%s119 + $0x158] sm:%s112]
                %172 = vst [vmem:[%s120 + $0xc8] sm:%s112] %v171
                %v173 = vld [vmem:[%s119 + $0x160] sm:%s112]
                %174 = vst [vmem:[%s120 + $0xd0] sm:%s112] %v173
                %v175 = vld [vmem:[%s119 + $0x168] sm:%s112]
                %176 = vst [vmem:[%s120 + $0xd8] sm:%s112] %v175
                %v177 = vld [vmem:[%s119 + $0x170] sm:%s112]
                %178 = vst [vmem:[%s120 + $0xe0] sm:%s112] %v177
                %v179 = vld [vmem:[%s119 + $0x178] sm:%s112]
                %180 = vst [vmem:[%s120 + $0xe8] sm:%s112] %v179
                %v181 = vld [vmem:[%s119 + $0x180] sm:%s112]
                %182 = vst [vmem:[%s120 + $0xf0] sm:%s112] %v181
                %v183 = vld [vmem:[%s119 + $0x188] sm:%s112]
                %184 = vst [vmem:[%s120 + $0xf8] sm:%s112] %v183
                %v185 = vld [vmem:[%s119 + $0x190] sm:%s112]
                %186 = vst [vmem:[%s120 + $0x100] sm:%s112] %v185
                %v187 = vld [vmem:[%s119 + $0x198] sm:%s112]
                %188 = vst [vmem:[%s120 + $0x108] sm:%s112] %v187
                %v189 = vld [vmem:[%s119 + $0x1a0] sm:%s112]
                %190 = vst [vmem:[%s120 + $0x110] sm:%s112] %v189
                %v191 = vld [vmem:[%s119 + $0x1a8] sm:%s112]
                %192 = vst [vmem:[%s120 + $0x118] sm:%s112] %v191
                %v193 = vld [vmem:[%s119 + $0x240] sm:%s112]
                %194 = vst [vmem:[%s120 + $0x120] sm:%s112] %v193
                %v195 = vld [vmem:[%s119 + $0x248] sm:%s112]
                %196 = vst [vmem:[%s120 + $0x128] sm:%s112] %v195
                %v197 = vld [vmem:[%s119 + $0x250] sm:%s112]
                %198 = vst [vmem:[%s120 + $0x130] sm:%s112] %v197
                %v199 = vld [vmem:[%s119 + $0x258] sm:%s112]
                %200 = vst [vmem:[%s120 + $0x138] sm:%s112] %v199
                %v201 = vld [vmem:[%s119 + $0x260] sm:%s112]
                %202 = vst [vmem:[%s120 + $0x140] sm:%s112] %v201
                %v203 = vld [vmem:[%s119 + $0x268] sm:%s112]
                %204 = vst [vmem:[%s120 + $0x148] sm:%s112] %v203
                %v205 = vld [vmem:[%s119 + $0x270] sm:%s112]
                %206 = vst [vmem:[%s120 + $0x150] sm:%s112] %v205
                %v207 = vld [vmem:[%s119 + $0x278] sm:%s112]
                %208 = vst [vmem:[%s120 + $0x158] sm:%s112] %v207
                %v209 = vld [vmem:[%s119 + $0x280] sm:%s112]
                %210 = vst [vmem:[%s120 + $0x160] sm:%s112] %v209
                %v211 = vld [vmem:[%s119 + $0x288] sm:%s112]
                %212 = vst [vmem:[%s120 + $0x168] sm:%s112] %v211
                %v213 = vld [vmem:[%s119 + $0x290] sm:%s112]
                %214 = vst [vmem:[%s120 + $0x170] sm:%s112] %v213
                %v215 = vld [vmem:[%s119 + $0x298] sm:%s112]
                %216 = vst [vmem:[%s120 + $0x178] sm:%s112] %v215
                %v217 = vld [vmem:[%s119 + $0x2a0] sm:%s112]
                %218 = vst [vmem:[%s120 + $0x180] sm:%s112] %v217
                %v219 = vld [vmem:[%s119 + $0x2a8] sm:%s112]
                %220 = vst [vmem:[%s120 + $0x188] sm:%s112] %v219
                %v221 = vld [vmem:[%s119 + $0x2b0] sm:%s112]
                %222 = vst [vmem:[%s120 + $0x190] sm:%s112] %v221
                %v223 = vld [vmem:[%s119 + $0x2b8] sm:%s112]
                %224 = vst [vmem:[%s120 + $0x198] sm:%s112] %v223
                %v225 = vld [vmem:[%s119 + $0x2c0] sm:%s112]
                %226 = vst [vmem:[%s120 + $0x1a0] sm:%s112] %v225
                %v227 = vld [vmem:[%s119 + $0x2c8] sm:%s112]
                %228 = vst [vmem:[%s120 + $0x1a8] sm:%s112] %v227
                %v229 = vld [vmem:[%s119 + $0x360] sm:%s112]
                %230 = vst [vmem:[%s120 + $0x1b0] sm:%s112] %v229
                %v231 = vld [vmem:[%s119 + $0x368] sm:%s112]
                %232 = vst [vmem:[%s120 + $0x1b8] sm:%s112] %v231
                %v233 = vld [vmem:[%s119 + $0x370] sm:%s112]
                %234 = vst [vmem:[%s120 + $0x1c0] sm:%s112] %v233
                %v235 = vld [vmem:[%s119 + $0x378] sm:%s112]
                %236 = vst [vmem:[%s120 + $0x1c8] sm:%s112] %v235
                %v237 = vld [vmem:[%s119 + $0x380] sm:%s112]
                %238 = vst [vmem:[%s120 + $0x1d0] sm:%s112] %v237
                %v239 = vld [vmem:[%s119 + $0x388] sm:%s112]
                %240 = vst [vmem:[%s120 + $0x1d8] sm:%s112] %v239
                %v241 = vld [vmem:[%s119 + $0x390] sm:%s112]
                %242 = vst [vmem:[%s120 + $0x1e0] sm:%s112] %v241
                %v243 = vld [vmem:[%s119 + $0x398] sm:%s112]
                %244 = vst [vmem:[%s120 + $0x1e8] sm:%s112] %v243
                %v245 = vld [vmem:[%s119 + $0x3a0] sm:%s112]
                %246 = vst [vmem:[%s120 + $0x1f0] sm:%s112] %v245
                %v247 = vld [vmem:[%s119 + $0x3a8] sm:%s112]
                %248 = vst [vmem:[%s120 + $0x1f8] sm:%s112] %v247
                %v249 = vld [vmem:[%s119 + $0x3b0] sm:%s112]
                %250 = vst [vmem:[%s120 + $0x200] sm:%s112] %v249
                %v251 = vld [vmem:[%s119 + $0x3b8] sm:%s112]
                %252 = vst [vmem:[%s120 + $0x208] sm:%s112] %v251
                %v253 = vld [vmem:[%s119 + $0x3c0] sm:%s112]
                %254 = vst [vmem:[%s120 + $0x210] sm:%s112] %v253
                %v255 = vld [vmem:[%s119 + $0x3c8] sm:%s112]
                %256 = vst [vmem:[%s120 + $0x218] sm:%s112] %v255
                %v257 = vld [vmem:[%s119 + $0x3d0] sm:%s112]
                %258 = vst [vmem:[%s120 + $0x220] sm:%s112] %v257
                %v259 = vld [vmem:[%s119 + $0x3d8] sm:%s112]
                %260 = vst [vmem:[%s120 + $0x228] sm:%s112] %v259
                %v261 = vld [vmem:[%s119 + $0x3e0] sm:%s112]
                %262 = vst [vmem:[%s120 + $0x230] sm:%s112] %v261
                %v263 = vld [vmem:[%s119 + $0x3e8] sm:%s112]
                %264 = vst [vmem:[%s120 + $0x238] sm:%s112] %v263
              $region37: #{blurpool.1} parent=31 // loop_footer
                %s118 = sadd.s32 1, %s114
              $region38: #{blurpool.1} parent=31 // loop_footer_branch
                %113 = sbr.rel target = $region34
              $region39: #{blurpool.1} parent=31 // loop_exit
                _
            $region32: #{blurpool.1} parent=23 // pred_fallthru
              _
          $region24: #{blurpool.1} parent=19 // pred_fallthru
            _
          %421 = vnop
        $region20: #{blurpool.1} parent=15 // pred_fallthru
          _
      $region16: #{blurpool.1} parent=5 // pred_fallthru
        _
      %p422 = scmp.le.s32.totalorder 1, %s7
      %p423 = scmp.lt.s32.totalorder %s7, 3
      %p424 = pnand %p422, %p423
      %p425 = pneg %p424
      // Predicated region
      $region55: #{blurpool.1} parent=5 // pred_check
        _
      $region56: #{blurpool.1} parent=5 // pred_check_branch
        %427 = sbr.rel (%p424) target = $region58
      $region57: #{blurpool.1} parent=5 // pred_region
        %s428 = ssub.s32 %s7, 1
        %s429 = sand.u32 %s34, 1
        %s430 = sand.u32 %s34, 1
        %s431 = smul.addr %s430, 576
        %s432 = scalar_lea.vmem [#allocation2], %s431
        // Predicated region
        $region59: #{blurpool.1} parent=57 // pred_check
          %p433 = pneg %p47
        $region60: #{blurpool.1} parent=57 // pred_check_branch
          %435 = sbr.rel (%p433) target = $region62
        $region61: #{blurpool.1} parent=57 // pred_region
          _
        $region62: #{blurpool.1} parent=57 // pred_fallthru
          _
        %s436 = sand.u32 %s34, 1
        %s437 = sand.u32 %s34, 1
        %s438 = smul.addr %s437, 576
        %s439 = scalar_lea.vmem [#allocation2], %s438
        %p440 = pneg %p47
        %p441 = pneg %p44
        %p442 = pneg %p75
        %p443 = pneg %p72
        %p444 = scmp.lt.s32.totalorder %s16, 1
        %s445 = scalar_select %p444, %s16, 1
        %p446 = scmp.lt.s32.totalorder %s17, 0
        %s447 = scalar_select %p446, %s17, 0
        %s448 = smul.addr %s445, 8
        %s449 = sadd.s32 %s447, %s448
        %s450 = smul.addr %s449, 8
        %s451 = scalar_lea.vmem %s1, %s450
        %p452 = scmp.lt.s32.totalorder %s16, 1
        %s453 = scalar_select %p452, %s16, 1
        %p454 = scmp.lt.s32.totalorder %s17, 0
        %s455 = scalar_select %p454, %s17, 0
        %s456 = smul.addr %s453, 8
        %s457 = sadd.s32 %s455, %s456
        %s458 = smul.addr %s457, 8
        %s459 = scalar_lea.vmem %s1, %s458
        %v460 = vld [vmem:[%s432] sm:$0xff]
        %v461 = vld [vmem:[%s432 + $0x10] sm:$0xff]
        %v462 = vld [vmem:[%s432 + $0x20] sm:$0xff]
        %v463 = vld [vmem:[%s432 + $0x30] sm:$0xff]
        %v464 = vld [vmem:[%s432 + $0x40] sm:$0xff]
        %v465 = vld [vmem:[%s432 + $0x50] sm:$0xff]
        %v466 = vld [vmem:[%s432 + $0x60] sm:$0xff]
        %v467 = vld [vmem:[%s432 + $0x70] sm:$0xff]
        %v468 = vld [vmem:[%s432 + $0x80] sm:$0xff]
        %v469 = vmul.f32 %v460, 0.125
        %v470 = vmul.f32 %v461, 0.125
        %v471 = vmul.f32 %v462, 0.125
        %v472 = vmul.f32 %v463, 0.125
        %v473 = vmul.f32 %v464, 0.125
        %v474 = vmul.f32 %v465, 0.125
        %v475 = vmul.f32 %v466, 0.125
        %v476 = vmul.f32 %v467, 0.125
        %v477 = vmul.f32 %v468, 0.125
        %s478 = scalar_lea.vmem %s432, 144 [#allocation2]
        %v479 = vld [vmem:[%s478] sm:$0xff]
        %v480 = vld [vmem:[%s478 + $0x10] sm:$0xff]
        %v481 = vld [vmem:[%s478 + $0x20] sm:$0xff]
        %v482 = vld [vmem:[%s478 + $0x30] sm:$0xff]
        %v483 = vld [vmem:[%s478 + $0x40] sm:$0xff]
        %v484 = vld [vmem:[%s478 + $0x50] sm:$0xff]
        %v485 = vld [vmem:[%s478 + $0x60] sm:$0xff]
        %v486 = vld [vmem:[%s478 + $0x70] sm:$0xff]
        %v487 = vld [vmem:[%s478 + $0x80] sm:$0xff]
        %v488 = vmul.f32 %v479, 0.375
        %v489 = vmul.f32 %v480, 0.375
        %v490 = vmul.f32 %v481, 0.375
        %v491 = vmul.f32 %v482, 0.375
        %v492 = vmul.f32 %v483, 0.375
        %v493 = vmul.f32 %v484, 0.375
        %v494 = vmul.f32 %v485, 0.375
        %v495 = vmul.f32 %v486, 0.375
        %v496 = vmul.f32 %v487, 0.375
        %v497 = vadd.f32 %v469, %v488
        %v498 = vadd.f32 %v470, %v489
        %v499 = vadd.f32 %v471, %v490
        %v500 = vadd.f32 %v472, %v491
        %v501 = vadd.f32 %v473, %v492
        %v502 = vadd.f32 %v474, %v493
        %v503 = vadd.f32 %v475, %v494
        %v504 = vadd.f32 %v476, %v495
        %v505 = vadd.f32 %v477, %v496
        %v506 = vld [vmem:[%s432 + $0x1] sm:$0xff]
        %v507 = vld [vmem:[%s432 + $0x11] sm:$0xff]
        %v508 = vld [vmem:[%s432 + $0x21] sm:$0xff]
        %v509 = vld [vmem:[%s432 + $0x31] sm:$0xff]
        %v510 = vld [vmem:[%s432 + $0x41] sm:$0xff]
        %v511 = vld [vmem:[%s432 + $0x51] sm:$0xff]
        %v512 = vld [vmem:[%s432 + $0x61] sm:$0xff]
        %v513 = vld [vmem:[%s432 + $0x71] sm:$0xff]
        %v514 = vld [vmem:[%s432 + $0x81] sm:$0xff]
        %v515 = vmul.f32 %v506, 0.375
        %v516 = vmul.f32 %v507, 0.375
        %v517 = vmul.f32 %v508, 0.375
        %v518 = vmul.f32 %v509, 0.375
        %v519 = vmul.f32 %v510, 0.375
        %v520 = vmul.f32 %v511, 0.375
        %v521 = vmul.f32 %v512, 0.375
        %v522 = vmul.f32 %v513, 0.375
        %v523 = vmul.f32 %v514, 0.375
        %v524 = vadd.f32 %v497, %v515
        %v525 = vadd.f32 %v498, %v516
        %v526 = vadd.f32 %v499, %v517
        %v527 = vadd.f32 %v500, %v518
        %v528 = vadd.f32 %v501, %v519
        %v529 = vadd.f32 %v502, %v520
        %v530 = vadd.f32 %v503, %v521
        %v531 = vadd.f32 %v504, %v522
        %v532 = vadd.f32 %v505, %v523
        %v533 = vld [vmem:[%s478 + $0x1] sm:$0xff]
        %v534 = vld [vmem:[%s478 + $0x11] sm:$0xff]
        %v535 = vld [vmem:[%s478 + $0x21] sm:$0xff]
        %v536 = vld [vmem:[%s478 + $0x31] sm:$0xff]
        %v537 = vld [vmem:[%s478 + $0x41] sm:$0xff]
        %v538 = vld [vmem:[%s478 + $0x51] sm:$0xff]
        %v539 = vld [vmem:[%s478 + $0x61] sm:$0xff]
        %v540 = vld [vmem:[%s478 + $0x71] sm:$0xff]
        %v541 = vld [vmem:[%s478 + $0x81] sm:$0xff]
        %v542 = vmul.f32 %v533, 0.125
        %v543 = vmul.f32 %v534, 0.125
        %v544 = vmul.f32 %v535, 0.125
        %v545 = vmul.f32 %v536, 0.125
        %v546 = vmul.f32 %v537, 0.125
        %v547 = vmul.f32 %v538, 0.125
        %v548 = vmul.f32 %v539, 0.125
        %v549 = vmul.f32 %v540, 0.125
        %v550 = vmul.f32 %v541, 0.125
        %v551 = vadd.f32 %v524, %v542
        %v552 = vadd.f32 %v525, %v543
        %v553 = vadd.f32 %v526, %v544
        %v554 = vadd.f32 %v527, %v545
        %v555 = vadd.f32 %v528, %v546
        %v556 = vadd.f32 %v529, %v547
        %v557 = vadd.f32 %v530, %v548
        %v558 = vadd.f32 %v531, %v549
        %v559 = vadd.f32 %v532, %v550
        %s560 = scalar_lea.vmem %s432, 288 [#allocation2]
        %v561 = vld [vmem:[%s560] sm:$0xff]
        %v562 = vld [vmem:[%s560 + $0x10] sm:$0xff]
        %v563 = vld [vmem:[%s560 + $0x20] sm:$0xff]
        %v564 = vld [vmem:[%s560 + $0x30] sm:$0xff]
        %v565 = vld [vmem:[%s560 + $0x40] sm:$0xff]
        %v566 = vld [vmem:[%s560 + $0x50] sm:$0xff]
        %v567 = vld [vmem:[%s560 + $0x60] sm:$0xff]
        %v568 = vld [vmem:[%s560 + $0x70] sm:$0xff]
        %v569 = vld [vmem:[%s560 + $0x80] sm:$0xff]
        %v570 = vmul.f32 %v561, 0.125
        %v571 = vmul.f32 %v562, 0.125
        %v572 = vmul.f32 %v563, 0.125
        %v573 = vmul.f32 %v564, 0.125
        %v574 = vmul.f32 %v565, 0.125
        %v575 = vmul.f32 %v566, 0.125
        %v576 = vmul.f32 %v567, 0.125
        %v577 = vmul.f32 %v568, 0.125
        %v578 = vmul.f32 %v569, 0.125
        %s579 = scalar_lea.vmem %s432, 432 [#allocation2]
        %v580 = vld [vmem:[%s579] sm:$0xff]
        %v581 = vld [vmem:[%s579 + $0x10] sm:$0xff]
        %v582 = vld [vmem:[%s579 + $0x20] sm:$0xff]
        %v583 = vld [vmem:[%s579 + $0x30] sm:$0xff]
        %v584 = vld [vmem:[%s579 + $0x40] sm:$0xff]
        %v585 = vld [vmem:[%s579 + $0x50] sm:$0xff]
        %v586 = vld [vmem:[%s579 + $0x60] sm:$0xff]
        %v587 = vld [vmem:[%s579 + $0x70] sm:$0xff]
        %v588 = vld [vmem:[%s579 + $0x80] sm:$0xff]
        %v589 = vmul.f32 %v580, 0.375
        %v590 = vmul.f32 %v581, 0.375
        %v591 = vmul.f32 %v582, 0.375
        %v592 = vmul.f32 %v583, 0.375
        %v593 = vmul.f32 %v584, 0.375
        %v594 = vmul.f32 %v585, 0.375
        %v595 = vmul.f32 %v586, 0.375
        %v596 = vmul.f32 %v587, 0.375
        %v597 = vmul.f32 %v588, 0.375
        %v598 = vadd.f32 %v570, %v589
        %v599 = vadd.f32 %v571, %v590
        %v600 = vadd.f32 %v572, %v591
        %v601 = vadd.f32 %v573, %v592
        %v602 = vadd.f32 %v574, %v593
        %v603 = vadd.f32 %v575, %v594
        %v604 = vadd.f32 %v576, %v595
        %v605 = vadd.f32 %v577, %v596
        %v606 = vadd.f32 %v578, %v597
        %v607 = vld [vmem:[%s560 + $0x1] sm:$0xff]
        %v608 = vld [vmem:[%s560 + $0x11] sm:$0xff]
        %v609 = vld [vmem:[%s560 + $0x21] sm:$0xff]
        %v610 = vld [vmem:[%s560 + $0x31] sm:$0xff]
        %v611 = vld [vmem:[%s560 + $0x41] sm:$0xff]
        %v612 = vld [vmem:[%s560 + $0x51] sm:$0xff]
        %v613 = vld [vmem:[%s560 + $0x61] sm:$0xff]
        %v614 = vld [vmem:[%s560 + $0x71] sm:$0xff]
        %v615 = vld [vmem:[%s560 + $0x81] sm:$0xff]
        %v616 = vmul.f32 %v607, 0.375
        %v617 = vmul.f32 %v608, 0.375
        %v618 = vmul.f32 %v609, 0.375
        %v619 = vmul.f32 %v610, 0.375
        %v620 = vmul.f32 %v611, 0.375
        %v621 = vmul.f32 %v612, 0.375
        %v622 = vmul.f32 %v613, 0.375
        %v623 = vmul.f32 %v614, 0.375
        %v624 = vmul.f32 %v615, 0.375
        %v625 = vadd.f32 %v598, %v616
        %v626 = vadd.f32 %v599, %v617
        %v627 = vadd.f32 %v600, %v618
        %v628 = vadd.f32 %v601, %v619
        %v629 = vadd.f32 %v602, %v620
        %v630 = vadd.f32 %v603, %v621
        %v631 = vadd.f32 %v604, %v622
        %v632 = vadd.f32 %v605, %v623
        %v633 = vadd.f32 %v606, %v624
        %v634 = vld [vmem:[%s579 + $0x1] sm:$0xff]
        %v635 = vld [vmem:[%s579 + $0x11] sm:$0xff]
        %v636 = vld [vmem:[%s579 + $0x21] sm:$0xff]
        %v637 = vld [vmem:[%s579 + $0x31] sm:$0xff]
        %v638 = vld [vmem:[%s579 + $0x41] sm:$0xff]
        %v639 = vld [vmem:[%s579 + $0x51] sm:$0xff]
        %v640 = vld [vmem:[%s579 + $0x61] sm:$0xff]
        %v641 = vld [vmem:[%s579 + $0x71] sm:$0xff]
        %v642 = vld [vmem:[%s579 + $0x81] sm:$0xff]
        %v643 = vmul.f32 %v634, 0.125
        %v644 = vmul.f32 %v635, 0.125
        %v645 = vmul.f32 %v636, 0.125
        %v646 = vmul.f32 %v637, 0.125
        %v647 = vmul.f32 %v638, 0.125
        %v648 = vmul.f32 %v639, 0.125
        %v649 = vmul.f32 %v640, 0.125
        %v650 = vmul.f32 %v641, 0.125
        %v651 = vmul.f32 %v642, 0.125
        %v652 = vadd.f32 %v625, %v643
        %v653 = vadd.f32 %v626, %v644
        %v654 = vadd.f32 %v627, %v645
        %v655 = vadd.f32 %v628, %v646
        %v656 = vadd.f32 %v629, %v647
        %v657 = vadd.f32 %v630, %v648
        %v658 = vadd.f32 %v631, %v649
        %v659 = vadd.f32 %v632, %v650
        %v660 = vadd.f32 %v633, %v651
        %v661 = vmul.f32 %v551, 0.125
        %v662 = vmul.f32 %v552, 0.125
        %v663 = vmul.f32 %v553, 0.125
        %v664 = vmul.f32 %v554, 0.125
        %v665 = vmul.f32 %v555, 0.125
        %v666 = vmul.f32 %v556, 0.125
        %v667 = vmul.f32 %v557, 0.125
        %v668 = vmul.f32 %v558, 0.125
        %v669 = vmul.f32 %v652, 0.375
        %v670 = vmul.f32 %v653, 0.375
        %v671 = vmul.f32 %v654, 0.375
        %v672 = vmul.f32 %v655, 0.375
        %v673 = vmul.f32 %v656, 0.375
        %v674 = vmul.f32 %v657, 0.375
        %v675 = vmul.f32 %v658, 0.375
        %v676 = vmul.f32 %v659, 0.375
        %v677 = vadd.f32 %v661, %v669
        %v678 = vadd.f32 %v662, %v670
        %v679 = vadd.f32 %v663, %v671
        %v680 = vadd.f32 %v664, %v672
        %v681 = vadd.f32 %v665, %v673
        %v682 = vadd.f32 %v666, %v674
        %v683 = vadd.f32 %v667, %v675
        %v684 = vadd.f32 %v668, %v676
        %v685 = vmul.f32 %v552, 0.375
        %v686 = vmul.f32 %v553, 0.375
        %v687 = vmul.f32 %v554, 0.375
        %v688 = vmul.f32 %v555, 0.375
        %v689 = vmul.f32 %v556, 0.375
        %v690 = vmul.f32 %v557, 0.375
        %v691 = vmul.f32 %v558, 0.375
        %v692 = vmul.f32 %v559, 0.375
        %v693 = vadd.f32 %v677, %v685
        %v694 = vadd.f32 %v678, %v686
        %v695 = vadd.f32 %v679, %v687
        %v696 = vadd.f32 %v680, %v688
        %v697 = vadd.f32 %v681, %v689
        %v698 = vadd.f32 %v682, %v690
        %v699 = vadd.f32 %v683, %v691
        %v700 = vadd.f32 %v684, %v692
        %v701 = vmul.f32 %v653, 0.125
        %v702 = vmul.f32 %v654, 0.125
        %v703 = vmul.f32 %v655, 0.125
        %v704 = vmul.f32 %v656, 0.125
        %v705 = vmul.f32 %v657, 0.125
        %v706 = vmul.f32 %v658, 0.125
        %v707 = vmul.f32 %v659, 0.125
        %v708 = vmul.f32 %v660, 0.125
        %v709 = vadd.f32 %v693, %v701
        %v710 = vadd.f32 %v694, %v702
        %v711 = vadd.f32 %v695, %v703
        %v712 = vadd.f32 %v696, %v704
        %v713 = vadd.f32 %v697, %v705
        %v714 = vadd.f32 %v698, %v706
        %v715 = vadd.f32 %v699, %v707
        %v716 = vadd.f32 %v700, %v708
        %vm717 = vcmask 31744
        %718 = vst.msk [vmem:[%s459] sm:$0xff] %vm717, %v709
        %719 = vst.msk [vmem:[%s459 + $0x8] sm:$0xff] %vm717, %v710
        %720 = vst.msk [vmem:[%s459 + $0x10] sm:$0xff] %vm717, %v711
        %721 = vst.msk [vmem:[%s459 + $0x18] sm:$0xff] %vm717, %v712
        %722 = vst.msk [vmem:[%s459 + $0x20] sm:$0xff] %vm717, %v713
        %723 = vst.msk [vmem:[%s459 + $0x28] sm:$0xff] %vm717, %v714
        %724 = vst.msk [vmem:[%s459 + $0x30] sm:$0xff] %vm717, %v715
        %725 = vst.msk [vmem:[%s459 + $0x38] sm:$0xff] %vm717, %v716
        %p726 = scmp.lt.s32.totalorder %s16, 1
        %s727 = scalar_select %p726, %s16, 1
        %p728 = scmp.lt.s32.totalorder %s17, 0
        %s729 = scalar_select %p728, %s17, 0
        %s730 = smul.addr %s727, 8
        %s731 = sadd.s32 %s729, %s730
        %s732 = smul.addr %s731, 8
        %s733 = scalar_lea.vmem %s1, %s732
        // Predicated region
        $region63: #{blurpool.1} parent=57 // pred_check
          %p734 = pneg %p72
        $region64: #{blurpool.1} parent=57 // pred_check_branch
          %736 = sbr.rel (%p734) target = $region66
        $region65: #{blurpool.1} parent=57 // pred_region
          _
        $region66: #{blurpool.1} parent=57 // pred_fallthru
          _
      $region58: #{blurpool.1} parent=5 // pred_fallthru
        _
      %p737 = scmp.le.s32.totalorder 2, %s7
      // Predicated region
      $region67: #{blurpool.1} parent=5 // pred_check
        %p738 = pneg %p737
      $region68: #{blurpool.1} parent=5 // pred_check_branch
        %740 = sbr.rel (%p738) target = $region70
      $region69: #{blurpool.1} parent=5 // pred_region
        %s741 = ssub.s32 %s7, 2
        // Predicated region
        $region71: #{blurpool.1} parent=69 // pred_check
          %p742 = pneg %p78
        $region72: #{blurpool.1} parent=69 // pred_check_branch
          %744 = sbr.rel (%p742) target = $region74
        $region73: #{blurpool.1} parent=69 // pred_region
          %p745 = scmp.lt.s32.totalorder %s18, 1
          %s746 = scalar_select %p745, %s18, 1
          %p747 = scmp.lt.s32.totalorder %s19, 0
          %s748 = scalar_select %p747, %s19, 0
          %s749 = smul.addr %s746, 8
          %s750 = sadd.s32 %s748, %s749
          %s751 = smul.addr %s750, 8
          %s752 = scalar_lea.vmem %s1, %s751
        $region74: #{blurpool.1} parent=69 // pred_fallthru
          _
      $region70: #{blurpool.1} parent=5 // pred_fallthru
        _
    $region6: #{blurpool.1} parent=1 // loop_footer
      %s11 = sadd.s32 1, %s7
    $region7: #{blurpool.1} parent=1 // loop_footer_branch
      %6 = sbr.rel target = $region3
    $region8: #{blurpool.1} parent=1 // loop_exit
      _

</llo_original>
